<compile_context>
chip_gen: v7x
topology: tpu7x:2x2x1
jax: 0.10.0
libtpu: 0.0.40
codegen_flags: <defaults>
</compile_context>

<pallas_src>
import jax
import jax.numpy as jnp
from jax.experimental import pallas as pl
from jax.experimental.pallas import tpu as pltpu

LANE = 128   # all feature dims padded into one 128-lane tile
HALF = 64    # state features / trunk use lanes [0:64), conditioning uses lanes [64:128)

# Row order of the 128x128 weight tiles inside the packed weight slab:
#   tile 0: block-diag(w1s, w1c)          -- trunk layer 1 (both MLPs)
#   tile 1: block-diag(w2s, w2c)          -- trunk layer 2 (both MLPs)
#   tile 2: [w1f_s ; w1f_c] stacked in K  -- final layer 1 (the concat matmul)
#   tile 3: w2f                           -- final layer 2 (logits)
_N_W_TILES = 4


def _round_up(x, m):
    return (x + m - 1) // m * m


def cond_policy_kernel(x_ref, w_ref, b_ref, out_ref):
    """Fused forward pass: state-MLP + conditioning-MLP (block-diagonal) + final-MLP.

    x_ref  : (TB, 128)  compute dtype; states in lanes [0:64), conditioning in [64:128)
    w_ref  : (512, 128) compute dtype; 4 packed 128x128 weight tiles (see header)
    b_ref  : (8, 128)   f32; bias row per layer (rows 0..3), zero-padded
    out_ref: (TB, 128)  f32; logits in lanes [0:n_actions), zeros elsewhere
    """
    f32 = jnp.float32
    cdt = x_ref.dtype  # compute dtype (bf16 in the default path, f32 for verification)

    def w(i):  # static, tile-aligned 128x128 view -> free
        return w_ref[i * LANE:(i + 1) * LANE, :]

    def b(i):  # single f32 bias row, broadcast over the batch tile
        return b_ref[i:i + 1, :]

    x = x_ref[...]

    # Trunk layer 1 (both MLPs in one block-diagonal matmul); ReLU in f32.
    # h lanes [0:H) = h_s, lanes [64:64+H) = h_c, all other lanes exactly zero.
    h = jnp.maximum(jnp.dot(x, w(0), preferred_element_type=f32) + b(0), 0.0)

    # Trunk layer 2 (block-diagonal). t lanes [0:T) = state_out, [64:64+T) = cond_out.
    t = jnp.dot(h.astype(cdt), w(1), preferred_element_type=f32) + b(1)

    # Final layer 1 on the implicit concat: rows K[0:T) of tile 2 hold w1f_s, rows
    # K[64:64+T) hold w1f_c, both writing the same output lanes -> exactly
    # concat([s_out, c_out]) @ w1f.  ReLU in f32.
    h_f = jnp.maximum(jnp.dot(t.astype(cdt), w(2), preferred_element_type=f32) + b(2), 0.0)

    # Final layer 2 -> logits in lanes [0:n_actions).
    out_ref[...] = (jnp.dot(h_f.astype(cdt), w(3), preferred_element_type=f32)
                    + b(3)).astype(out_ref.dtype)


def pack_params(params, dtype):
    """Pack the 3 MLPs into one (512,128) block-diagonal weight slab and one (8,128) bias slab.

    Zero padding is exact: padded lanes of every intermediate activation remain identically
    zero through all layers (zero inputs x zero-padded weight columns + zero bias).
    """
    sd = params["w1s"].shape[0]
    cd = params["w1c"].shape[0]
    H = params["w1s"].shape[1]      # hidden
    T = params["w2s"].shape[1]      # trunk output dim
    na = params["w2f"].shape[1]     # n_actions
    # Block-diagonal packing needs every trunk dim in a 64-lane half tile.
    assert max(sd, cd, H, T) <= HALF and na <= LANE, \
        "block-diagonal packing assumes state/cond/hidden/trunk dims <= 64 and n_actions <= 128"

    def tile():
        return jnp.zeros((LANE, LANE), jnp.float32)

    w1 = (tile().at[:sd, :H].set(params["w1s"])
                .at[HALF:HALF + cd, HALF:HALF + H].set(params["w1c"]))
    w2 = (tile().at[:H, :T].set(params["w2s"])
                .at[HALF:HALF + H, HALF:HALF + T].set(params["w2c"]))
    w1f = (tile().at[:T, :H].set(params["w1f_s"])
                 .at[HALF:HALF + T, :H].set(params["w1f_c"]))
    w2f = tile().at[:H, :na].set(params["w2f"])
    w_slab = jnp.concatenate([w1, w2, w1f, w2f], axis=0).astype(dtype)   # (512, 128)

    b_slab = jnp.zeros((8, LANE), jnp.float32)
    b_slab = (b_slab.at[0, :H].set(params["b1s"].reshape(-1))
                    .at[0, HALF:HALF + H].set(params["b1c"].reshape(-1)))
    b_slab = (b_slab.at[1, :T].set(params["b2s"].reshape(-1))
                    .at[1, HALF:HALF + T].set(params["b2c"].reshape(-1)))
    b_slab = b_slab.at[2, :H].set(params["b1f"].reshape(-1))
    b_slab = b_slab.at[3, :na].set(params["b2f"].reshape(-1))
    return w_slab, b_slab


def pack_inputs(states, conditioning, b_pad, dtype):
    """Lane-pack states (lanes [0:64)) and conditioning (lanes [64:128)) into one (B_pad,128) slab."""
    B, sd = states.shape
    _, cd = conditioning.shape
    assert sd <= HALF and cd <= HALF, "packing assumes state_dim, cond_dim <= 64"
    x = jnp.zeros((b_pad, LANE), jnp.float32)
    x = x.at[:B, :sd].set(states.astype(jnp.float32))
    x = x.at[:B, HALF:HALF + cd].set(conditioning.astype(jnp.float32))
    return x.astype(dtype)


def conditional_discrete_policy_forward(states, conditioning, params, n_actions, *,
                                        tb=1024, compute_dtype=jnp.bfloat16):
    """Fused forward pass. One pallas_call, 3 packed operands, 4 matmuls, lane-dense output."""
    B, state_dim = states.shape
    cond_dim = conditioning.shape[1]
    hidden = params["w1s"].shape[1]
    trunk_out = params["w2s"].shape[1]
    assert n_actions <= LANE

    # --- tile / grid sizing (review feedback) ---
    # Minimal-padding tiling: pick the number of grid steps first, then the smallest
    # 8-aligned tile covering the batch, so padding never exceeds one extra tile-row group.
    B8 = _round_up(B, 8)
    tb_cap = max(_round_up(tb, 8), 8)
    n_steps = -(-B8 // tb_cap)                       # ceil(B8 / tb_cap)
    if n_steps == 1 and B8 >= 16:
        n_steps = 2                                  # v7x: give both TensorCores a tile
    TB = _round_up(-(-B8 // n_steps), 8)
    B_pad = TB * n_steps
    grid = (n_steps,)

    x_slab = pack_inputs(states, conditioning, B_pad, compute_dtype)
    w_slab, b_slab = pack_params(params, compute_dtype)

    # Advisory cost hint (true, unpadded flop count for the fused 4-matmul structure).
    flops = 2 * B * (state_dim * hidden + cond_dim * hidden
                     + 2 * hidden * trunk_out
                     + 2 * trunk_out * hidden + hidden * n_actions)
    itemsize = jnp.dtype(compute_dtype).itemsize
    bytes_accessed = int(itemsize * (x_slab.size + w_slab.size)
                         + 4 * b_slab.size + 4 * B_pad * LANE)
    cost = pl.CostEstimate(flops=flops, transcendentals=0, bytes_accessed=bytes_accessed)

    out = pl.pallas_call(
        cond_policy_kernel,
        out_shape=jax.ShapeDtypeStruct((B_pad, LANE), jnp.float32),
        grid=grid,
        in_specs=[
            pl.BlockSpec((TB, LANE), lambda i: (i, 0)),               # activations: streamed
            pl.BlockSpec((_N_W_TILES * LANE, LANE), lambda i: (0, 0)),  # weights: resident
            pl.BlockSpec((8, LANE), lambda i: (0, 0)),                # biases: resident
        ],
        out_specs=pl.BlockSpec((TB, LANE), lambda i: (i, 0)),         # lane-dense output
        compiler_params=pltpu.CompilerParams(
            dimension_semantics=("parallel",),   # v7x: shard batch tiles over both TCs
            vmem_limit_bytes=16 * 1024 * 1024,   # real footprint ~1-2 MiB; leave headroom
        ),
        cost_estimate=cost,
    )(x_slab, w_slab, b_slab)

    logits = out[:B, :n_actions]
    # DiscretePolicyEstimator.expected_output_dim (forward policy) == n_actions
    assert logits.shape[-1] == n_actions
    return logits


def init_params(key, state_dim, cond_dim, hidden, trunk_out, n_actions):
    """Deterministic synthetic parameters matching the 3-MLP module shapes
    (weights stored as (in_features, out_features); PyTorch-style uniform init)."""
    ks = jax.random.split(key, 6)

    def lin(k, fan_in, fan_out):
        kw, kb = jax.random.split(k)
        scale = 1.0 / jnp.sqrt(fan_in)
        w = jax.random.uniform(kw, (fan_in, fan_out), jnp.float32, -scale, scale)
        b = jax.random.uniform(kb, (1, fan_out), jnp.float32, -scale, scale)
        return w, b

    w1s, b1s = lin(ks[0], state_dim, hidden)
    w2s, b2s = lin(ks[1], hidden, trunk_out)
    w1c, b1c = lin(ks[2], cond_dim, hidden)
    w2c, b2c = lin(ks[3], hidden, trunk_out)
    # final module input dim = trunk_out (state) + trunk_out (conditioning)
    w1f, b1f = lin(ks[4], 2 * trunk_out, hidden)
    w2f, b2f = lin(ks[5], hidden, n_actions)
    return dict(
        w1s=w1s, b1s=b1s, w2s=w2s, b2s=b2s,
        w1c=w1c, b1c=b1c, w2c=w2c, b2c=b2c,
        w1f_s=w1f[:trunk_out, :], w1f_c=w1f[trunk_out:, :], b1f=b1f,
        w2f=w2f, b2f=b2f,
    )


def reference_forward(states, conditioning, params):
    """Pure-JAX f32 reference (same math, explicit concat) for verification."""
    h_s = jnp.maximum(states @ params["w1s"] + params["b1s"], 0.0)
    s_out = h_s @ params["w2s"] + params["b2s"]
    h_c = jnp.maximum(conditioning @ params["w1c"] + params["b1c"], 0.0)
    c_out = h_c @ params["w2c"] + params["b2c"]
    cat = jnp.concatenate([s_out, c_out], axis=-1)
    w1f = jnp.concatenate([params["w1f_s"], params["w1f_c"]], axis=0)
    h_f = jnp.maximum(cat @ w1f + params["b1f"], 0.0)
    return h_f @ params["w2f"] + params["b2f"]


if __name__ == "__main__":
    B, STATE_DIM, COND_DIM = 8, 16, 8
    HIDDEN, TRUNK_OUT, N_ACTIONS = 32, 32, 8

    key = jax.random.PRNGKey(0)
    k_s, k_c, k_p = jax.random.split(key, 3)
    # preprocessor(states) -> float tensor of shape (batch, state_dim) (IdentityPreprocessor)
    states = jax.random.normal(k_s, (B, STATE_DIM), jnp.float32)
    conditioning = jax.random.normal(k_c, (B, COND_DIM), jnp.float32)
    params = init_params(k_p, STATE_DIM, COND_DIM, HIDDEN, TRUNK_OUT, N_ACTIONS)

    ref = reference_forward(states, conditioning, params)

    # 1) f32 compute path: bit-tight structural verification of the block-diagonal packing.
    out_f32 = conditional_discrete_policy_forward(
        states, conditioning, params, N_ACTIONS, compute_dtype=jnp.float32)
    out_f32 = jax.block_until_ready(out_f32)
    assert out_f32.shape == (B, N_ACTIONS)
    assert jnp.allclose(out_f32, ref, atol=1e-5, rtol=1e-5), "f32 mismatch vs JAX reference"

    # 2) Default bf16 compute path (production mode): f32 accumulation, looser tolerance.
    out_bf16 = conditional_discrete_policy_forward(
        states, conditioning, params, N_ACTIONS)
    out_bf16 = jax.block_until_ready(out_bf16)
    assert out_bf16.shape == (B, N_ACTIONS)
    assert jnp.allclose(out_bf16, ref, atol=5e-2, rtol=5e-2), "bf16 mismatch vs JAX reference"

    print("KERNEL_OK")
</pallas_src>

<mosaic_0001>
module attributes {stable_mosaic.version = 11 : i64} {
  func.func @cond_policy_kernel(%arg0: i32, %arg1: memref<8x128xf32, #tpu.memory_space<vmem>>, %arg2: memref<512x128xf32, #tpu.memory_space<vmem>>, %arg3: memref<8x128xf32, #tpu.memory_space<vmem>>, %arg4: memref<8x128xf32, #tpu.memory_space<vmem>>) attributes {dimension_semantics = [#tpu.dimension_semantics<parallel>], iteration_bounds = array<i64: 1>, scalar_prefetch = 0 : i64, scratch_operands = 0 : i64, tpu.core_type = #tpu.core_type<tc>, window_params = [{transform_indices = @transform_0, window_bounds = array<i64: 8, 128>}, {pipeline_mode = #tpu.pipeline_mode<synchronous>, transform_indices = @transform_1, window_bounds = array<i64: 512, 128>}, {pipeline_mode = #tpu.pipeline_mode<synchronous>, transform_indices = @transform_2, window_bounds = array<i64: 8, 128>}, {transform_indices = @transform_3, window_bounds = array<i64: 8, 128>}]} {
    %c0 = arith.constant 0 : index
    %c0_0 = arith.constant 0 : index
    %0 = vector.load %arg1[%c0, %c0_0] : memref<8x128xf32, #tpu.memory_space<vmem>>, vector<8x128xf32>
    %c0_1 = arith.constant 0 : index
    %c0_2 = arith.constant 0 : index
    %1 = vector.load %arg2[%c0_1, %c0_2] : memref<512x128xf32, #tpu.memory_space<vmem>>, vector<128x128xf32>
    %cst = arith.constant dense<0.000000e+00> : vector<8x128xf32>
    %2 = tpu.matmul %0, %1, %cst {dimension_numbers = #tpu.dot_dimension_numbers<[1], [0], [0], [1], [0, 0, 1, 1], [], []>} : vector<8x128xf32>, vector<128x128xf32>, vector<8x128xf32> -> vector<8x128xf32>
    %c0_3 = arith.constant 0 : index
    %c0_4 = arith.constant 0 : index
    %3 = vector.load %arg3[%c0_3, %c0_4] : memref<8x128xf32, #tpu.memory_space<vmem>>, vector<1x128xf32>
    %4 = vector.broadcast %3 : vector<1x128xf32> to vector<8x128xf32>
    %5 = arith.addf %2, %4 : vector<8x128xf32>
    %cst_5 = arith.constant 0.000000e+00 : f32
    %6 = vector.broadcast %cst_5 : f32 to vector<8x128xf32>
    %7 = arith.maximumf %5, %6 : vector<8x128xf32>
    %c128 = arith.constant 128 : index
    %c0_6 = arith.constant 0 : index
    %8 = vector.load %arg2[%c128, %c0_6] : memref<512x128xf32, #tpu.memory_space<vmem>>, vector<128x128xf32>
    %cst_7 = arith.constant dense<0.000000e+00> : vector<8x128xf32>
    %9 = tpu.matmul %7, %8, %cst_7 {dimension_numbers = #tpu.dot_dimension_numbers<[1], [0], [0], [1], [0, 0, 1, 1], [], []>} : vector<8x128xf32>, vector<128x128xf32>, vector<8x128xf32> -> vector<8x128xf32>
    %c1 = arith.constant 1 : index
    %c0_8 = arith.constant 0 : index
    %10 = vector.load %arg3[%c1, %c0_8] : memref<8x128xf32, #tpu.memory_space<vmem>>, vector<1x128xf32>
    %11 = vector.broadcast %10 : vector<1x128xf32> to vector<8x128xf32>
    %12 = arith.addf %9, %11 : vector<8x128xf32>
    %c256 = arith.constant 256 : index
    %c0_9 = arith.constant 0 : index
    %13 = vector.load %arg2[%c256, %c0_9] : memref<512x128xf32, #tpu.memory_space<vmem>>, vector<128x128xf32>
    %cst_10 = arith.constant dense<0.000000e+00> : vector<8x128xf32>
    %14 = tpu.matmul %12, %13, %cst_10 {dimension_numbers = #tpu.dot_dimension_numbers<[1], [0], [0], [1], [0, 0, 1, 1], [], []>} : vector<8x128xf32>, vector<128x128xf32>, vector<8x128xf32> -> vector<8x128xf32>
    %c2 = arith.constant 2 : index
    %c0_11 = arith.constant 0 : index
    %15 = vector.load %arg3[%c2, %c0_11] : memref<8x128xf32, #tpu.memory_space<vmem>>, vector<1x128xf32>
    %16 = vector.broadcast %15 : vector<1x128xf32> to vector<8x128xf32>
    %17 = arith.addf %14, %16 : vector<8x128xf32>
    %cst_12 = arith.constant 0.000000e+00 : f32
    %18 = vector.broadcast %cst_12 : f32 to vector<8x128xf32>
    %19 = arith.maximumf %17, %18 : vector<8x128xf32>
    %c384 = arith.constant 384 : index
    %c0_13 = arith.constant 0 : index
    %20 = vector.load %arg2[%c384, %c0_13] : memref<512x128xf32, #tpu.memory_space<vmem>>, vector<128x128xf32>
    %cst_14 = arith.constant dense<0.000000e+00> : vector<8x128xf32>
    %21 = tpu.matmul %19, %20, %cst_14 {dimension_numbers = #tpu.dot_dimension_numbers<[1], [0], [0], [1], [0, 0, 1, 1], [], []>} : vector<8x128xf32>, vector<128x128xf32>, vector<8x128xf32> -> vector<8x128xf32>
    %c3 = arith.constant 3 : index
    %c0_15 = arith.constant 0 : index
    %22 = vector.load %arg3[%c3, %c0_15] : memref<8x128xf32, #tpu.memory_space<vmem>>, vector<1x128xf32>
    %23 = vector.broadcast %22 : vector<1x128xf32> to vector<8x128xf32>
    %24 = arith.addf %21, %23 : vector<8x128xf32>
    %c0_16 = arith.constant 0 : index
    %c0_17 = arith.constant 0 : index
    %25 = vector.load %arg4[%c0_16, %c0_17] : memref<8x128xf32, #tpu.memory_space<vmem>>, vector<8x128xf32>
    tpu.vector_store %arg4[%c0_16, %c0_17], %24 {strides = array<i32>} : memref<8x128xf32, #tpu.memory_space<vmem>>, vector<8x128xf32>,
    return
  }
  func.func @transform_0(%arg0: i32) -> (i32, i32) {
    %c0_i32 = arith.constant 0 : i32
    %c0_i32_0 = arith.constant 0 : i32
    return %arg0, %c0_i32 : i32, i32
  }
  func.func @transform_1(%arg0: i32) -> (i32, i32) {
    %c0_i32 = arith.constant 0 : i32
    %c0_i32_0 = arith.constant 0 : i32
    %c0_i32_1 = arith.constant 0 : i32
    return %c0_i32, %c0_i32_0 : i32, i32
  }
  func.func @transform_2(%arg0: i32) -> (i32, i32) {
    %c0_i32 = arith.constant 0 : i32
    %c0_i32_0 = arith.constant 0 : i32
    %c0_i32_1 = arith.constant 0 : i32
    return %c0_i32, %c0_i32_0 : i32, i32
  }
  func.func @transform_3(%arg0: i32) -> (i32, i32) {
    %c0_i32 = arith.constant 0 : i32
    %c0_i32_0 = arith.constant 0 : i32
    return %arg0, %c0_i32 : i32, i32
  }
}

</mosaic_0001>

<llo_original>
// kernel: tpu_custom_call.1
$region0: #{tpu_custom_call.1}
  #allocation0 [shape = 'u32[]', space=smem, size = 0x4, offset = 0x4, fixed_abs, tag = 'smem constant byte address 0x4 - core index']
  #allocation1 [shape = 'u32[144,128]{1,0:T(1,128)}', space=vmem, size = 0x12000, scoped, tag = 'internal scratch']
  %s0 = inlined_call_operand.hbm [shape: f32[8,128], index: 0, kind: input, shape index: {}]
  %s1 = inlined_call_operand.hbm [shape: f32[512,128], index: 1, kind: input, shape index: {}]
  %s2 = inlined_call_operand.hbm [shape: f32[8,128], index: 2, kind: input, shape index: {}]
  %s3 = inlined_call_operand.hbm [shape: f32[8,128], index: 3, kind: output, shape index: {}]
  %s4 = sld [smem:[#allocation0]]
  $region34: #{tpu_custom_call.1} parent=0
    _
  %s6 = ssub.s32 1, %s4
  %s7 = scalar_select 0, %s6, %s4
  $region1: #{tpu_custom_call.1} parent=0
    #allocation2 [shape = 'u8[4096]{0}', space=vmem, size = 0x1000, scoped, tag = 'input window, operand 0, single buffered']
    #allocation3 [shape = 's32[1]{0}', space=sflag, size = 0x4, scoped, tag = 'scoped memory for tpu_custom_call.1']
    #allocation4 [shape = 's32[1]{0}', space=sflag, size = 0x4, scoped, tag = 'scoped memory for tpu_custom_call.1']
    #allocation5 [shape = 'u8[262144]{0}', space=vmem, size = 0x40000, scoped, tag = 'input window, operand 1, single buffered']
    #allocation6 [shape = 's32[1]{0}', space=sflag, size = 0x4, scoped, tag = 'scoped memory for tpu_custom_call.1']
    #allocation7 [shape = 'u8[4096]{0}', space=vmem, size = 0x1000, scoped, tag = 'input window, operand 2, single buffered']
    #allocation8 [shape = 'u8[4096]{0}', space=vmem, size = 0x1000, scoped, tag = 'output window, operand 0, single buffered']
    %8 = vsyncpa [#allocation3], 0
    %9 = vsyncpa [#allocation6], 0
    %10 = vsyncpa [#allocation4], 0
    // Predicated region
    $region2: #{tpu_custom_call.1} parent=1 // pred_check
      _
    $region3: #{tpu_custom_call.1} parent=1 // pred_check_branch
      %12 = sbr.rel (0) target = $region5
    $region4: #{tpu_custom_call.1} parent=1 // pred_region
      %s14 = ssub.s32 128, 128
      %15 = vsyncadd [#allocation3], %s14
      %s17 = sshll.u32 [#allocation2], 4
      %s18 = int_to_ptr.vmem [resolvable:$true] %s17
      %20 = dma.hbm_to_vmem [thread:$0]  %s0, 128, %s18, [#allocation3]
    $region5: #{tpu_custom_call.1} parent=1 // pred_fallthru
      _
    // Predicated region
    $region6: #{tpu_custom_call.1} parent=1 // pred_check
      _
    $region7: #{tpu_custom_call.1} parent=1 // pred_check_branch
      %22 = sbr.rel (0) target = $region9
    $region8: #{tpu_custom_call.1} parent=1 // pred_region
      %s24 = ssub.s32 8192, 8192
      %25 = vsyncadd [#allocation6], %s24
      %s26 = sshll.u32 [#allocation5], 4
      %s27 = int_to_ptr.vmem [resolvable:$true] %s26
      %32 = dma.hbm_to_vmem [thread:$0]  %s1, 8192, %s27, [#allocation6], 128, 128, 8
    $region9: #{tpu_custom_call.1} parent=1 // pred_fallthru
      _
    // Predicated region
    $region10: #{tpu_custom_call.1} parent=1 // pred_check
      _
    $region11: #{tpu_custom_call.1} parent=1 // pred_check_branch
      %34 = sbr.rel (0) target = $region13
    $region12: #{tpu_custom_call.1} parent=1 // pred_region
      %s36 = ssub.s32 128, 128
      %37 = vsyncadd [#allocation6], %s36
      %s39 = sshll.u32 [#allocation7], 4
      %s40 = int_to_ptr.vmem [resolvable:$true] %s39
      %42 = dma.hbm_to_vmem [thread:$0]  %s2, 128, %s40, [#allocation6]
    $region13: #{tpu_custom_call.1} parent=1 // pred_fallthru
      _
    // Predicated region
    $region14: #{tpu_custom_call.1} parent=1 // pred_check
      _
    $region15: #{tpu_custom_call.1} parent=1 // pred_check_branch
      %44 = sbr.rel (0) target = $region17
    $region16: #{tpu_custom_call.1} parent=1 // pred_region
      %45 = dma.done [#allocation3], 128
    $region17: #{tpu_custom_call.1} parent=1 // pred_fallthru
      _
    // Predicated region
    $region18: #{tpu_custom_call.1} parent=1 // pred_check
      _
    $region19: #{tpu_custom_call.1} parent=1 // pred_check_branch
      %47 = sbr.rel (0) target = $region21
    $region20: #{tpu_custom_call.1} parent=1 // pred_region
      %48 = dma.done [#allocation6], 8192
    $region21: #{tpu_custom_call.1} parent=1 // pred_fallthru
      _
    // Predicated region
    $region22: #{tpu_custom_call.1} parent=1 // pred_check
      _
    $region23: #{tpu_custom_call.1} parent=1 // pred_check_branch
      %50 = sbr.rel (0) target = $region25
    $region24: #{tpu_custom_call.1} parent=1 // pred_region
      %51 = dma.done [#allocation6], 128
    $region25: #{tpu_custom_call.1} parent=1 // pred_fallthru
      _
    %v52 = vld [vmem:[#allocation2] sm:$0xff]
    %v53 = vld [vmem:[#allocation5] sm:$0xff]
    %v54 = vld [vmem:[#allocation5 + $0x8] sm:$0xff]
    %v55 = vld [vmem:[#allocation5 + $0x10] sm:$0xff]
    %v56 = vld [vmem:[#allocation5 + $0x18] sm:$0xff]
    %v57 = vld [vmem:[#allocation5 + $0x20] sm:$0xff]
    %v58 = vld [vmem:[#allocation5 + $0x28] sm:$0xff]
    %v59 = vld [vmem:[#allocation5 + $0x30] sm:$0xff]
    %v60 = vld [vmem:[#allocation5 + $0x38] sm:$0xff]
    %v61 = vld [vmem:[#allocation5 + $0x40] sm:$0xff]
    %v62 = vld [vmem:[#allocation5 + $0x48] sm:$0xff]
    %v63 = vld [vmem:[#allocation5 + $0x50] sm:$0xff]
    %v64 = vld [vmem:[#allocation5 + $0x58] sm:$0xff]
    %v65 = vld [vmem:[#allocation5 + $0x60] sm:$0xff]
    %v66 = vld [vmem:[#allocation5 + $0x68] sm:$0xff]
    %v67 = vld [vmem:[#allocation5 + $0x70] sm:$0xff]
    %v68 = vld [vmem:[#allocation5 + $0x78] sm:$0xff]
    %v69 = vld [vmem:[#allocation7] sm:$0x1]
    %v70 = vlaneseq
    %v71 = vshrl.u32 %v70, 7
    %v72 = vsub.s32 0, %v71
    %v73 = vrot.slane %v69, %v72
    %74 = vmatprep.subr.mxu0 0.0
    %75 = vmatpush1.msra.mxu0 %v53
    %76 = vmatprep.subr.mxu0 0.0
    %77 = vmatpush1.msra.mxu0 %v54
    %78 = vmatprep.subr.mxu0 0.0
    %79 = vmatpush1.msra.mxu0 %v55
    %80 = vmatprep.subr.mxu0 0.0
    %81 = vmatpush1.msra.mxu0 %v56
    %82 = vmatprep.subr.mxu0 0.0
    %83 = vmatpush1.msra.mxu0 %v57
    %84 = vmatprep.subr.mxu0 0.0
    %85 = vmatpush1.msra.mxu0 %v58
    %86 = vmatprep.subr.mxu0 0.0
    %87 = vmatpush1.msra.mxu0 %v59
    %88 = vmatprep.subr.mxu0 0.0
    %89 = vmatpush1.msra.mxu0 %v60
    %90 = vmatprep.subr.mxu0 0.0
    %91 = vmatpush1.msra.mxu0 %v61
    %92 = vmatprep.subr.mxu0 0.0
    %93 = vmatpush1.msra.mxu0 %v62
    %94 = vmatprep.subr.mxu0 0.0
    %95 = vmatpush1.msra.mxu0 %v63
    %96 = vmatprep.subr.mxu0 0.0
    %97 = vmatpush1.msra.mxu0 %v64
    %98 = vmatprep.subr.mxu0 0.0
    %99 = vmatpush1.msra.mxu0 %v65
    %100 = vmatprep.subr.mxu0 0.0
    %101 = vmatpush1.msra.mxu0 %v66
    %102 = vmatprep.subr.mxu0 0.0
    %103 = vmatpush1.msra.mxu0 %v67
    %104 = vmatprep.subr.mxu0 0.0
    %105 = vmatpush1.msra.mxu0 %v68
    %106 = vmatprep.subr.mxu0 0.0
    %107 = vmatpush1.msra.mxu0 0.0
    %108 = vmatprep.subr.mxu0 0.0
    %109 = vmatpush1.msra.mxu0 0.0
    %110 = vmatprep.subr.mxu0 0.0
    %111 = vmatpush1.msra.mxu0 0.0
    %112 = vmatprep.subr.mxu0 0.0
    %113 = vmatpush1.msra.mxu0 0.0
    %114 = vmatprep.subr.mxu0 0.0
    %115 = vmatpush1.msra.mxu0 0.0
    %116 = vmatprep.subr.mxu0 0.0
    %117 = vmatpush1.msra.mxu0 0.0
    %118 = vmatprep.subr.mxu0 0.0
    %119 = vmatpush1.msra.mxu0 0.0
    %120 = vmatprep.subr.mxu0 0.0
    %121 = vmatpush1.msra.mxu0 0.0
    %122 = vmatprep.subr.mxu0 0.0
    %123 = vmatpush1.msra.mxu0 0.0
    %124 = vmatprep.subr.mxu0 0.0
    %125 = vmatpush1.msra.mxu0 0.0
    %126 = vmatprep.subr.mxu0 0.0
    %127 = vmatpush1.msra.mxu0 0.0
    %128 = vmatprep.subr.mxu0 0.0
    %129 = vmatpush1.msra.mxu0 0.0
    %130 = vmatprep.subr.mxu0 0.0
    %131 = vmatpush1.msra.mxu0 0.0
    %132 = vmatprep.subr.mxu0 0.0
    %133 = vmatpush1.msra.mxu0 0.0
    %134 = vmatprep.subr.mxu0 0.0
    %135 = vmatpush1.msra.mxu0 0.0
    %136 = vmatprep.subr.mxu0 0.0
    %137 = vmatpush1.msra.mxu0 0.0
    %138 = vmatprep.mubr.f32.mxu0 0.0
    %139 = vmatmul.mubr.f32.gmra.mrb[0].mxu0 %v52
    %v140 = vpop.f32.mrb[0].mxu0
    %v141 = vadd.f32 %v73, %v140
    %v142 = vpop.f32.mrb[0].mxu0
    %143 = vdwg.mxu0
    %v144 = vmax.f32 %v141, 0.0
    %v145 = vld [vmem:[#allocation5 + $0x80] sm:$0xff]
    %v146 = vld [vmem:[#allocation5 + $0x88] sm:$0xff]
    %v147 = vld [vmem:[#allocation5 + $0x90] sm:$0xff]
    %v148 = vld [vmem:[#allocation5 + $0x98] sm:$0xff]
    %v149 = vld [vmem:[#allocation5 + $0xa0] sm:$0xff]
    %v150 = vld [vmem:[#allocation5 + $0xa8] sm:$0xff]
    %v151 = vld [vmem:[#allocation5 + $0xb0] sm:$0xff]
    %v152 = vld [vmem:[#allocation5 + $0xb8] sm:$0xff]
    %v153 = vld [vmem:[#allocation5 + $0xc0] sm:$0xff]
    %v154 = vld [vmem:[#allocation5 + $0xc8] sm:$0xff]
    %v155 = vld [vmem:[#allocation5 + $0xd0] sm:$0xff]
    %v156 = vld [vmem:[#allocation5 + $0xd8] sm:$0xff]
    %v157 = vld [vmem:[#allocation5 + $0xe0] sm:$0xff]
    %v158 = vld [vmem:[#allocation5 + $0xe8] sm:$0xff]
    %v159 = vld [vmem:[#allocation5 + $0xf0] sm:$0xff]
    %v160 = vld [vmem:[#allocation5 + $0xf8] sm:$0xff]
    %v161 = vld [vmem:[#allocation7 + $0x1] sm:$0x1]
    %v162 = vlaneseq
    %v163 = vshrl.u32 %v162, 7
    %v164 = vsub.s32 0, %v163
    %v165 = vrot.slane %v161, %v164
    %166 = vmatprep.subr.mxu0 0.0
    %167 = vmatpush1.msra.mxu0 %v145
    %168 = vmatprep.subr.mxu0 0.0
    %169 = vmatpush1.msra.mxu0 %v146
    %170 = vmatprep.subr.mxu0 0.0
    %171 = vmatpush1.msra.mxu0 %v147
    %172 = vmatprep.subr.mxu0 0.0
    %173 = vmatpush1.msra.mxu0 %v148
    %174 = vmatprep.subr.mxu0 0.0
    %175 = vmatpush1.msra.mxu0 %v149
    %176 = vmatprep.subr.mxu0 0.0
    %177 = vmatpush1.msra.mxu0 %v150
    %178 = vmatprep.subr.mxu0 0.0
    %179 = vmatpush1.msra.mxu0 %v151
    %180 = vmatprep.subr.mxu0 0.0
    %181 = vmatpush1.msra.mxu0 %v152
    %182 = vmatprep.subr.mxu0 0.0
    %183 = vmatpush1.msra.mxu0 %v153
    %184 = vmatprep.subr.mxu0 0.0
    %185 = vmatpush1.msra.mxu0 %v154
    %186 = vmatprep.subr.mxu0 0.0
    %187 = vmatpush1.msra.mxu0 %v155
    %188 = vmatprep.subr.mxu0 0.0
    %189 = vmatpush1.msra.mxu0 %v156
    %190 = vmatprep.subr.mxu0 0.0
    %191 = vmatpush1.msra.mxu0 %v157
    %192 = vmatprep.subr.mxu0 0.0
    %193 = vmatpush1.msra.mxu0 %v158
    %194 = vmatprep.subr.mxu0 0.0
    %195 = vmatpush1.msra.mxu0 %v159
    %196 = vmatprep.subr.mxu0 0.0
    %197 = vmatpush1.msra.mxu0 %v160
    %198 = vmatprep.subr.mxu0 0.0
    %199 = vmatpush1.msra.mxu0 0.0
    %200 = vmatprep.subr.mxu0 0.0
    %201 = vmatpush1.msra.mxu0 0.0
    %202 = vmatprep.subr.mxu0 0.0
    %203 = vmatpush1.msra.mxu0 0.0
    %204 = vmatprep.subr.mxu0 0.0
    %205 = vmatpush1.msra.mxu0 0.0
    %206 = vmatprep.subr.mxu0 0.0
    %207 = vmatpush1.msra.mxu0 0.0
    %208 = vmatprep.subr.mxu0 0.0
    %209 = vmatpush1.msra.mxu0 0.0
    %210 = vmatprep.subr.mxu0 0.0
    %211 = vmatpush1.msra.mxu0 0.0
    %212 = vmatprep.subr.mxu0 0.0
    %213 = vmatpush1.msra.mxu0 0.0
    %214 = vmatprep.subr.mxu0 0.0
    %215 = vmatpush1.msra.mxu0 0.0
    %216 = vmatprep.subr.mxu0 0.0
    %217 = vmatpush1.msra.mxu0 0.0
    %218 = vmatprep.subr.mxu0 0.0
    %219 = vmatpush1.msra.mxu0 0.0
    %220 = vmatprep.subr.mxu0 0.0
    %221 = vmatpush1.msra.mxu0 0.0
    %222 = vmatprep.subr.mxu0 0.0
    %223 = vmatpush1.msra.mxu0 0.0
    %224 = vmatprep.subr.mxu0 0.0
    %225 = vmatpush1.msra.mxu0 0.0
    %226 = vmatprep.subr.mxu0 0.0
    %227 = vmatpush1.msra.mxu0 0.0
    %228 = vmatprep.subr.mxu0 0.0
    %229 = vmatpush1.msra.mxu0 0.0
    %230 = vmatprep.mubr.f32.mxu0 0.0
    %231 = vmatmul.mubr.f32.gmra.mrb[0].mxu0 %v144
    %v232 = vpop.f32.mrb[0].mxu0
    %v233 = vadd.f32 %v165, %v232
    %v234 = vpop.f32.mrb[0].mxu0
    %235 = vdwg.mxu0
    %v236 = vld [vmem:[#allocation5 + $0x100] sm:$0xff]
    %v237 = vld [vmem:[#allocation5 + $0x108] sm:$0xff]
    %v238 = vld [vmem:[#allocation5 + $0x110] sm:$0xff]
    %v239 = vld [vmem:[#allocation5 + $0x118] sm:$0xff]
    %v240 = vld [vmem:[#allocation5 + $0x120] sm:$0xff]
    %v241 = vld [vmem:[#allocation5 + $0x128] sm:$0xff]
    %v242 = vld [vmem:[#allocation5 + $0x130] sm:$0xff]
    %v243 = vld [vmem:[#allocation5 + $0x138] sm:$0xff]
    %v244 = vld [vmem:[#allocation5 + $0x140] sm:$0xff]
    %v245 = vld [vmem:[#allocation5 + $0x148] sm:$0xff]
    %v246 = vld [vmem:[#allocation5 + $0x150] sm:$0xff]
    %v247 = vld [vmem:[#allocation5 + $0x158] sm:$0xff]
    %v248 = vld [vmem:[#allocation5 + $0x160] sm:$0xff]
    %v249 = vld [vmem:[#allocation5 + $0x168] sm:$0xff]
    %v250 = vld [vmem:[#allocation5 + $0x170] sm:$0xff]
    %v251 = vld [vmem:[#allocation5 + $0x178] sm:$0xff]
    %v252 = vld [vmem:[#allocation7 + $0x2] sm:$0x1]
    %v253 = vlaneseq
    %v254 = vshrl.u32 %v253, 7
    %v255 = vsub.s32 0, %v254
    %v256 = vrot.slane %v252, %v255
    %257 = vmatprep.subr.mxu0 0.0
    %258 = vmatpush1.msra.mxu0 %v236
    %259 = vmatprep.subr.mxu0 0.0
    %260 = vmatpush1.msra.mxu0 %v237
    %261 = vmatprep.subr.mxu0 0.0
    %262 = vmatpush1.msra.mxu0 %v238
    %263 = vmatprep.subr.mxu0 0.0
    %264 = vmatpush1.msra.mxu0 %v239
    %265 = vmatprep.subr.mxu0 0.0
    %266 = vmatpush1.msra.mxu0 %v240
    %267 = vmatprep.subr.mxu0 0.0
    %268 = vmatpush1.msra.mxu0 %v241
    %269 = vmatprep.subr.mxu0 0.0
    %270 = vmatpush1.msra.mxu0 %v242
    %271 = vmatprep.subr.mxu0 0.0
    %272 = vmatpush1.msra.mxu0 %v243
    %273 = vmatprep.subr.mxu0 0.0
    %274 = vmatpush1.msra.mxu0 %v244
    %275 = vmatprep.subr.mxu0 0.0
    %276 = vmatpush1.msra.mxu0 %v245
    %277 = vmatprep.subr.mxu0 0.0
    %278 = vmatpush1.msra.mxu0 %v246
    %279 = vmatprep.subr.mxu0 0.0
    %280 = vmatpush1.msra.mxu0 %v247
    %281 = vmatprep.subr.mxu0 0.0
    %282 = vmatpush1.msra.mxu0 %v248
    %283 = vmatprep.subr.mxu0 0.0
    %284 = vmatpush1.msra.mxu0 %v249
    %285 = vmatprep.subr.mxu0 0.0
    %286 = vmatpush1.msra.mxu0 %v250
    %287 = vmatprep.subr.mxu0 0.0
    %288 = vmatpush1.msra.mxu0 %v251
    %289 = vmatprep.subr.mxu0 0.0
    %290 = vmatpush1.msra.mxu0 0.0
    %291 = vmatprep.subr.mxu0 0.0
    %292 = vmatpush1.msra.mxu0 0.0
    %293 = vmatprep.subr.mxu0 0.0
    %294 = vmatpush1.msra.mxu0 0.0
    %295 = vmatprep.subr.mxu0 0.0
    %296 = vmatpush1.msra.mxu0 0.0
    %297 = vmatprep.subr.mxu0 0.0
    %298 = vmatpush1.msra.mxu0 0.0
    %299 = vmatprep.subr.mxu0 0.0
    %300 = vmatpush1.msra.mxu0 0.0
    %301 = vmatprep.subr.mxu0 0.0
    %302 = vmatpush1.msra.mxu0 0.0
    %303 = vmatprep.subr.mxu0 0.0
    %304 = vmatpush1.msra.mxu0 0.0
    %305 = vmatprep.subr.mxu0 0.0
    %306 = vmatpush1.msra.mxu0 0.0
    %307 = vmatprep.subr.mxu0 0.0
    %308 = vmatpush1.msra.mxu0 0.0
    %309 = vmatprep.subr.mxu0 0.0
    %310 = vmatpush1.msra.mxu0 0.0
    %311 = vmatprep.subr.mxu0 0.0
    %312 = vmatpush1.msra.mxu0 0.0
    %313 = vmatprep.subr.mxu0 0.0
    %314 = vmatpush1.msra.mxu0 0.0
    %315 = vmatprep.subr.mxu0 0.0
    %316 = vmatpush1.msra.mxu0 0.0
    %317 = vmatprep.subr.mxu0 0.0
    %318 = vmatpush1.msra.mxu0 0.0
    %319 = vmatprep.subr.mxu0 0.0
    %320 = vmatpush1.msra.mxu0 0.0
    %321 = vmatprep.mubr.f32.mxu0 0.0
    %322 = vmatmul.mubr.f32.gmra.mrb[0].mxu0 %v233
    %v323 = vpop.f32.mrb[0].mxu0
    %v324 = vadd.f32 %v256, %v323
    %v325 = vpop.f32.mrb[0].mxu0
    %326 = vdwg.mxu0
    %v327 = vmax.f32 %v324, 0.0
    %v328 = vld [vmem:[#allocation5 + $0x180] sm:$0xff]
    %v329 = vld [vmem:[#allocation5 + $0x188] sm:$0xff]
    %v330 = vld [vmem:[#allocation5 + $0x190] sm:$0xff]
    %v331 = vld [vmem:[#allocation5 + $0x198] sm:$0xff]
    %v332 = vld [vmem:[#allocation5 + $0x1a0] sm:$0xff]
    %v333 = vld [vmem:[#allocation5 + $0x1a8] sm:$0xff]
    %v334 = vld [vmem:[#allocation5 + $0x1b0] sm:$0xff]
    %v335 = vld [vmem:[#allocation5 + $0x1b8] sm:$0xff]
    %v336 = vld [vmem:[#allocation5 + $0x1c0] sm:$0xff]
    %v337 = vld [vmem:[#allocation5 + $0x1c8] sm:$0xff]
    %v338 = vld [vmem:[#allocation5 + $0x1d0] sm:$0xff]
    %v339 = vld [vmem:[#allocation5 + $0x1d8] sm:$0xff]
    %v340 = vld [vmem:[#allocation5 + $0x1e0] sm:$0xff]
    %v341 = vld [vmem:[#allocation5 + $0x1e8] sm:$0xff]
    %v342 = vld [vmem:[#allocation5 + $0x1f0] sm:$0xff]
    %v343 = vld [vmem:[#allocation5 + $0x1f8] sm:$0xff]
    %v344 = vld [vmem:[#allocation7 + $0x3] sm:$0x1]
    %v345 = vlaneseq
    %v346 = vshrl.u32 %v345, 7
    %v347 = vsub.s32 0, %v346
    %v348 = vrot.slane %v344, %v347
    %349 = vmatprep.subr.mxu0 0.0
    %350 = vmatpush1.msra.mxu0 %v328
    %351 = vmatprep.subr.mxu0 0.0
    %352 = vmatpush1.msra.mxu0 %v329
    %353 = vmatprep.subr.mxu0 0.0
    %354 = vmatpush1.msra.mxu0 %v330
    %355 = vmatprep.subr.mxu0 0.0
    %356 = vmatpush1.msra.mxu0 %v331
    %357 = vmatprep.subr.mxu0 0.0
    %358 = vmatpush1.msra.mxu0 %v332
    %359 = vmatprep.subr.mxu0 0.0
    %360 = vmatpush1.msra.mxu0 %v333
    %361 = vmatprep.subr.mxu0 0.0
    %362 = vmatpush1.msra.mxu0 %v334
    %363 = vmatprep.subr.mxu0 0.0
    %364 = vmatpush1.msra.mxu0 %v335
    %365 = vmatprep.subr.mxu0 0.0
    %366 = vmatpush1.msra.mxu0 %v336
    %367 = vmatprep.subr.mxu0 0.0
    %368 = vmatpush1.msra.mxu0 %v337
    %369 = vmatprep.subr.mxu0 0.0
    %370 = vmatpush1.msra.mxu0 %v338
    %371 = vmatprep.subr.mxu0 0.0
    %372 = vmatpush1.msra.mxu0 %v339
    %373 = vmatprep.subr.mxu0 0.0
    %374 = vmatpush1.msra.mxu0 %v340
    %375 = vmatprep.subr.mxu0 0.0
    %376 = vmatpush1.msra.mxu0 %v341
    %377 = vmatprep.subr.mxu0 0.0
    %378 = vmatpush1.msra.mxu0 %v342
    %379 = vmatprep.subr.mxu0 0.0
    %380 = vmatpush1.msra.mxu0 %v343
    %381 = vmatprep.subr.mxu0 0.0
    %382 = vmatpush1.msra.mxu0 0.0
    %383 = vmatprep.subr.mxu0 0.0
    %384 = vmatpush1.msra.mxu0 0.0
    %385 = vmatprep.subr.mxu0 0.0
    %386 = vmatpush1.msra.mxu0 0.0
    %387 = vmatprep.subr.mxu0 0.0
    %388 = vmatpush1.msra.mxu0 0.0
    %389 = vmatprep.subr.mxu0 0.0
    %390 = vmatpush1.msra.mxu0 0.0
    %391 = vmatprep.subr.mxu0 0.0
    %392 = vmatpush1.msra.mxu0 0.0
    %393 = vmatprep.subr.mxu0 0.0
    %394 = vmatpush1.msra.mxu0 0.0
    %395 = vmatprep.subr.mxu0 0.0
    %396 = vmatpush1.msra.mxu0 0.0
    %397 = vmatprep.subr.mxu0 0.0
    %398 = vmatpush1.msra.mxu0 0.0
    %399 = vmatprep.subr.mxu0 0.0
    %400 = vmatpush1.msra.mxu0 0.0
    %401 = vmatprep.subr.mxu0 0.0
    %402 = vmatpush1.msra.mxu0 0.0
    %403 = vmatprep.subr.mxu0 0.0
    %404 = vmatpush1.msra.mxu0 0.0
    %405 = vmatprep.subr.mxu0 0.0
    %406 = vmatpush1.msra.mxu0 0.0
    %407 = vmatprep.subr.mxu0 0.0
    %408 = vmatpush1.msra.mxu0 0.0
    %409 = vmatprep.subr.mxu0 0.0
    %410 = vmatpush1.msra.mxu0 0.0
    %411 = vmatprep.subr.mxu0 0.0
    %412 = vmatpush1.msra.mxu0 0.0
    %413 = vmatprep.mubr.f32.mxu0 0.0
    %414 = vmatmul.mubr.f32.gmra.mrb[0].mxu0 %v327
    %v415 = vpop.f32.mrb[0].mxu0
    %v416 = vadd.f32 %v348, %v415
    %v417 = vpop.f32.mrb[0].mxu0
    %418 = vdwg.mxu0
    %419 = vst [vmem:[#allocation8] sm:$0xff] %v416
    // Predicated region
    $region26: #{tpu_custom_call.1} parent=1 // pred_check
      _
    $region27: #{tpu_custom_call.1} parent=1 // pred_check_branch
      %421 = sbr.rel (0) target = $region29
    $region28: #{tpu_custom_call.1} parent=1 // pred_region
      %s423 = ssub.s32 128, 128
      %424 = vsyncadd [#allocation4], %s423
      %s426 = sshll.u32 [#allocation8], 4
      %s427 = int_to_ptr.vmem [resolvable:$true] %s426
      %429 = dma.vmem_to_hbm [thread:$0]  %s427, 128, %s3, [#allocation4]
    $region29: #{tpu_custom_call.1} parent=1 // pred_fallthru
      _
    // Predicated region
    $region30: #{tpu_custom_call.1} parent=1 // pred_check
      _
    $region31: #{tpu_custom_call.1} parent=1 // pred_check_branch
      %431 = sbr.rel (0) target = $region33
    $region32: #{tpu_custom_call.1} parent=1 // pred_region
      %432 = dma.done [#allocation4], 128
    $region33: #{tpu_custom_call.1} parent=1 // pred_fallthru
      _
    %433 = vsyncpa [#allocation3], 1
    %434 = vsyncpa [#allocation6], 1
    %435 = vsyncpa [#allocation4], 1

</llo_original>
